<compile_context>
chip_gen: v5e
topology: v5e:2x2
jax: 0.10.0
libtpu: 0.0.40
codegen_flags: <defaults>
</compile_context>

<pallas_src>
import math

import jax
import jax.numpy as jnp
from jax import lax
from jax.experimental import pallas as pl
from jax.experimental.pallas import tpu as pltpu

EPS = 1e-5


def _bn_relu_epilogue(y, gb_ref):
    """Training-mode BatchNorm1d (+affine) + ReLU on a full-batch (B, tn) f32 tile."""
    inv_b = 1.0 / y.shape[0]
    mean = jnp.sum(y, axis=0, keepdims=True) * inv_b            # (1, tn)
    mean_sq = jnp.sum(y * y, axis=0, keepdims=True) * inv_b     # (1, tn)
    var = mean_sq - mean * mean                                  # biased variance
    gamma = gb_ref[0:1, :]
    beta = gb_ref[1:2, :]
    scale = gamma * lax.rsqrt(var + EPS)                         # rsqrt rides the EUP slot
    shift = beta - mean * scale
    # Folded normalize + affine + ReLU: 2 elementwise passes over (B, tn).
    return jnp.maximum(y * scale + shift, 0.0)


def slp_kernel_fused(x_ref, w_ref, gb_ref, o_ref):
    """Fast path: whole K in one block.  x_ref is the full (B, D_in) bf16 input,
    resident in VMEM across all j steps (constant index_map)."""
    y = jnp.dot(x_ref[...], w_ref[...], preferred_element_type=jnp.float32)
    o_ref[...] = _bn_relu_epilogue(y, gb_ref).astype(o_ref.dtype)


def slp_kernel_tiled(x_ref, w_ref, gb_ref, o_ref):
    """Fallback for large D_in: grid (j, k), o_ref is the f32 accumulator
    (its block index (0, j) is constant across k, so it stays VMEM-resident)."""
    k = pl.program_id(1)

    @pl.when(k == 0)
    def _():
        o_ref[...] = jnp.zeros_like(o_ref)

    o_ref[...] += jnp.dot(x_ref[...], w_ref[...], preferred_element_type=jnp.float32)

    @pl.when(k == pl.num_programs(1) - 1)
    def _():
        # BN stats need the FULL batch -- correct because B is never tiled.
        o_ref[...] = _bn_relu_epilogue(o_ref[...], gb_ref).astype(o_ref.dtype)


def _pick_out_tile(d_out):
    """Lane-dense (multiple of 128) output tile; prefer >= 2 tiles so the
    'parallel' j axis can shard across v7x's two TensorCores."""
    if d_out % 128 != 0:
        return d_out                       # full-extent block bypasses (8,128) rule
    target = max(128, min(512, d_out // 2))
    t = (target // 128) * 128
    while t >= 128:
        if d_out % t == 0:
            return t
        t -= 128
    return d_out


def _pick_k_tile(d_in, target=2048):
    """Large streaming K tile (amortizes per-step overhead, nears HBM roofline)."""
    if d_in % 128 != 0 or d_in <= target:
        return d_in
    t = (target // 128) * 128
    while t >= 128:
        if d_in % t == 0:
            return t
        t -= 128
    return d_in


def single_layer_perceptron(x, w, gamma_beta):
    """x: (B, D_in) f32; w: (D_in, D_out) bf16; gamma_beta: (2, D_out) f32.
    Returns ReLU(BatchNorm1d_train(x @ w)) as (B, D_out) f32."""
    assert x.ndim == 2, "SingleLayerPerceptron expects a 2-D input"
    B, D_in = x.shape
    D_out = w.shape[1]

    # Cast x to bf16 once here (single XLA op), not per grid step inside the kernel.
    x_bf16 = x.astype(jnp.bfloat16)

    tn = _pick_out_tile(D_out)
    out_shape = jax.ShapeDtypeStruct((B, D_out), jnp.float32)
    compiler_params = pltpu.CompilerParams(
        dimension_semantics=("parallel",),
        vmem_limit_bytes=32 << 20,   # safe on v5e/v6e (128 MiB) and v7x (64 MiB)
    )

    x_bytes = B * D_in * 2
    w_tile_bytes = D_in * tn * 2
    if x_bytes <= (2 << 20) and w_tile_bytes <= (4 << 20):
        # ---- Fast path: single K block, x whole-resident, no pl.when, no scratch.
        grid = (D_out // tn,)
        return pl.pallas_call(
            slp_kernel_fused,
            out_shape=out_shape,
            grid=grid,
            in_specs=[
                pl.BlockSpec((B, D_in), lambda j: (0, 0)),   # x: fetched once, resident
                pl.BlockSpec((D_in, tn), lambda j: (0, j)),  # w (bf16), streamed per j
                pl.BlockSpec((2, tn), lambda j: (0, j)),     # [gamma; beta]
            ],
            out_specs=pl.BlockSpec((B, tn), lambda j: (0, j)),
            compiler_params=compiler_params,
        )(x_bf16, w, gamma_beta)

    # ---- Fallback: tile K as well (output ref doubles as the f32 accumulator).
    tk = _pick_k_tile(D_in)
    assert D_out % tn == 0 and D_in % tk == 0
    grid = (D_out // tn, D_in // tk)
    return pl.pallas_call(
        slp_kernel_tiled,
        out_shape=out_shape,
        grid=grid,
        in_specs=[
            pl.BlockSpec((B, tk), lambda j, k: (0, k)),      # x tile
            pl.BlockSpec((tk, tn), lambda j, k: (k, j)),     # w tile (bf16)
            pl.BlockSpec((2, tn), lambda j, k: (0, j)),      # [gamma; beta]
        ],
        out_specs=pl.BlockSpec((B, tn), lambda j, k: (0, j)),
        compiler_params=pltpu.CompilerParams(
            dimension_semantics=("parallel", "arbitrary"),
            vmem_limit_bytes=32 << 20,
        ),
    )(x_bf16, w, gamma_beta)


def init_params(key, input_size, output_size):
    # nn.Linear default init: weight, bias ~ U(-k, k), k = 1/sqrt(fan_in).
    kw, kb = jax.random.split(key)
    bound = 1.0 / math.sqrt(input_size)
    w_f32 = jax.random.uniform(
        kw, (input_size, output_size), jnp.float32, minval=-bound, maxval=bound
    )
    b = jax.random.uniform(
        kb, (1, output_size), jnp.float32, minval=-bound, maxval=bound
    )
    # Weights stored bf16 in HBM (halves the dominant weight DMA); bias only
    # feeds the reference -- it is cancelled by BN's batch-mean subtraction.
    w = w_f32.astype(jnp.bfloat16)
    # BatchNorm1d affine params at module init: gamma=1, beta=0, packed (2, D_out).
    gamma_beta = jnp.concatenate(
        [jnp.ones((1, output_size), jnp.float32),
         jnp.zeros((1, output_size), jnp.float32)],
        axis=0,
    )
    return w, b, gamma_beta


def reference(x, w_bf16, b, gamma_beta):
    # Same numerical recipe as the PyTorch module (Linear WITH bias ->
    # BatchNorm1d training mode -> ReLU), using the same bf16 matmul operands.
    y = jnp.dot(x.astype(jnp.bfloat16), w_bf16, preferred_element_type=jnp.float32)
    y = y + b
    mean = jnp.mean(y, axis=0, keepdims=True)
    var = jnp.mean((y - mean) ** 2, axis=0, keepdims=True)
    y_hat = (y - mean) / jnp.sqrt(var + EPS)
    gamma, beta = gamma_beta[0:1, :], gamma_beta[1:2, :]
    return jnp.maximum(y_hat * gamma + beta, 0.0)


if __name__ == "__main__":
    key = jax.random.PRNGKey(0)
    k_x, k_p, k_g, k_b = jax.random.split(key, 4)

    B, D_in, D_out = 8, 256, 256  # module defaults: Linear(256, 256)
    x = jax.random.normal(k_x, (B, D_in), jnp.float32)
    w, b, gamma_beta = init_params(k_p, D_in, D_out)
    # Perturb gamma/beta away from (1, 0) so the affine path is actually exercised.
    gamma_beta = gamma_beta + 0.1 * jax.random.normal(k_g, gamma_beta.shape, jnp.float32)

    out = jax.block_until_ready(single_layer_perceptron(x, w, gamma_beta))

    ref = reference(x, w, b, gamma_beta)
    assert out.shape == (B, D_out)
    assert jnp.allclose(out, ref, atol=1e-4, rtol=1e-4), "mismatch vs reference"

    print("KERNEL_OK")
</pallas_src>

<mosaic_0001>
module attributes {stable_mosaic.version = 11 : i64} {
  func.func @slp_kernel_fused(%arg0: i32, %arg1: memref<8x256xbf16, #tpu.memory_space<vmem>>, %arg2: memref<256x128xbf16, #tpu.memory_space<vmem>>, %arg3: memref<2x128xf32, #tpu.memory_space<vmem>>, %arg4: memref<8x128xf32, #tpu.memory_space<vmem>>) attributes {dimension_semantics = [#tpu.dimension_semantics<parallel>], iteration_bounds = array<i64: 2>, scalar_prefetch = 0 : i64, scratch_operands = 0 : i64, tpu.core_type = #tpu.core_type<tc>, window_params = [{pipeline_mode = #tpu.pipeline_mode<synchronous>, transform_indices = @transform_0, window_bounds = array<i64: 8, 256>}, {transform_indices = @transform_1, window_bounds = array<i64: 256, 128>}, {transform_indices = @transform_2, window_bounds = array<i64: 2, 128>}, {transform_indices = @transform_3, window_bounds = array<i64: 8, 128>}]} {
    %c0 = arith.constant 0 : index
    %c0_0 = arith.constant 0 : index
    %0 = vector.load %arg1[%c0, %c0_0] : memref<8x256xbf16, #tpu.memory_space<vmem>>, vector<8x256xbf16>
    %c0_1 = arith.constant 0 : index
    %c0_2 = arith.constant 0 : index
    %1 = vector.load %arg2[%c0_1, %c0_2] : memref<256x128xbf16, #tpu.memory_space<vmem>>, vector<256x128xbf16>
    %cst = arith.constant dense<0.000000e+00> : vector<8x128xf32>
    %2 = tpu.matmul %0, %1, %cst {dimension_numbers = #tpu.dot_dimension_numbers<[1], [0], [0], [1], [0, 0, 1, 1], [], []>} : vector<8x256xbf16>, vector<256x128xbf16>, vector<8x128xf32> -> vector<8x128xf32>
    %cst_3 = arith.constant dense<0.000000e+00> : vector<128xf32>
    %3 = vector.multi_reduction <add>, %2, %cst_3 [0] : vector<8x128xf32> to vector<128xf32>
    %4 = vector.shape_cast %3 : vector<128xf32> to vector<1x128xf32>
    %cst_4 = arith.constant 1.250000e-01 : f32
    %5 = vector.broadcast %cst_4 : f32 to vector<1x128xf32>
    %6 = arith.mulf %4, %5 : vector<1x128xf32>
    %7 = arith.mulf %2, %2 : vector<8x128xf32>
    %cst_5 = arith.constant dense<0.000000e+00> : vector<128xf32>
    %8 = vector.multi_reduction <add>, %7, %cst_5 [0] : vector<8x128xf32> to vector<128xf32>
    %9 = vector.shape_cast %8 : vector<128xf32> to vector<1x128xf32>
    %cst_6 = arith.constant 1.250000e-01 : f32
    %10 = vector.broadcast %cst_6 : f32 to vector<1x128xf32>
    %11 = arith.mulf %9, %10 : vector<1x128xf32>
    %12 = arith.mulf %6, %6 : vector<1x128xf32>
    %13 = arith.subf %11, %12 : vector<1x128xf32>
    %c0_7 = arith.constant 0 : index
    %c0_8 = arith.constant 0 : index
    %14 = vector.load %arg3[%c0_7, %c0_8] : memref<2x128xf32, #tpu.memory_space<vmem>>, vector<1x128xf32>
    %c1 = arith.constant 1 : index
    %c0_9 = arith.constant 0 : index
    %15 = vector.load %arg3[%c1, %c0_9] : memref<2x128xf32, #tpu.memory_space<vmem>>, vector<1x128xf32>
    %cst_10 = arith.constant 9.99999974E-6 : f32
    %16 = vector.broadcast %cst_10 : f32 to vector<1x128xf32>
    %17 = arith.addf %13, %16 : vector<1x128xf32>
    %18 = math.rsqrt %17 : vector<1x128xf32>
    %19 = arith.mulf %14, %18 : vector<1x128xf32>
    %20 = arith.mulf %6, %19 : vector<1x128xf32>
    %21 = arith.subf %15, %20 : vector<1x128xf32>
    %22 = vector.broadcast %19 : vector<1x128xf32> to vector<8x128xf32>
    %23 = arith.mulf %2, %22 : vector<8x128xf32>
    %24 = vector.broadcast %21 : vector<1x128xf32> to vector<8x128xf32>
    %25 = arith.addf %23, %24 : vector<8x128xf32>
    %cst_11 = arith.constant 0.000000e+00 : f32
    %26 = vector.broadcast %cst_11 : f32 to vector<8x128xf32>
    %27 = arith.maximumf %25, %26 : vector<8x128xf32>
    %c0_12 = arith.constant 0 : index
    %c0_13 = arith.constant 0 : index
    %28 = vector.load %arg4[%c0_12, %c0_13] : memref<8x128xf32, #tpu.memory_space<vmem>>, vector<8x128xf32>
    tpu.vector_store %arg4[%c0_12, %c0_13], %27 {strides = array<i32>} : memref<8x128xf32, #tpu.memory_space<vmem>>, vector<8x128xf32>,
    return
  }
  func.func @transform_0(%arg0: i32) -> (i32, i32) {
    %c0_i32 = arith.constant 0 : i32
    %c0_i32_0 = arith.constant 0 : i32
    %c0_i32_1 = arith.constant 0 : i32
    return %c0_i32, %c0_i32_0 : i32, i32
  }
  func.func @transform_1(%arg0: i32) -> (i32, i32) {
    %c0_i32 = arith.constant 0 : i32
    %c0_i32_0 = arith.constant 0 : i32
    return %c0_i32, %arg0 : i32, i32
  }
  func.func @transform_2(%arg0: i32) -> (i32, i32) {
    %c0_i32 = arith.constant 0 : i32
    %c0_i32_0 = arith.constant 0 : i32
    return %c0_i32, %arg0 : i32, i32
  }
  func.func @transform_3(%arg0: i32) -> (i32, i32) {
    %c0_i32 = arith.constant 0 : i32
    %c0_i32_0 = arith.constant 0 : i32
    return %c0_i32, %arg0 : i32, i32
  }
}

</mosaic_0001>

<llo_original>
// kernel: tpu_custom_call.1
$region0: #{tpu_custom_call.1}
  #allocation0 [shape = 'u32[]', space=smem, size = 0x4, offset = 0x4, fixed_abs, tag = 'smem constant byte address 0x4 - core index']
  #allocation1 [shape = 'u32[72,128]{1,0:T(1,128)}', space=vmem, size = 0x9000, scoped, tag = 'internal scratch']
  %s0 = inlined_call_operand.hbm [shape: bf16[8,256], index: 0, kind: input, shape index: {}]
  %s1 = inlined_call_operand.hbm [shape: bf16[256,256], index: 1, kind: input, shape index: {}]
  %s2 = inlined_call_operand.hbm [shape: f32[2,256], index: 2, kind: input, shape index: {}]
  %s3 = inlined_call_operand.hbm [shape: f32[8,256], index: 3, kind: output, shape index: {}]
  %s4 = sld [smem:[#allocation0]]
  $region57: #{tpu_custom_call.1} parent=0
    _
  %s6 = ssub.s32 1, %s4
  %s7 = scalar_select 0, %s6, %s4
  $region1: #{tpu_custom_call.1} parent=0
    #allocation2 [shape = 'u8[4096]{0}', space=vmem, size = 0x1000, scoped, tag = 'input window, operand 0, single buffered']
    #allocation3 [shape = 's32[2]{0}', space=sflag, size = 0x8, scoped, tag = 'scoped memory for tpu_custom_call.1']
    #allocation4 [shape = 's32[2]{0}', space=sflag, size = 0x8, scoped, tag = 'scoped memory for tpu_custom_call.1']
    #allocation5 [shape = 'u8[131072]{0}', space=vmem, size = 0x20000, scoped, tag = 'input window, operand 1']
    #allocation6 [shape = 's32[2]{0}', space=sflag, size = 0x8, scoped, tag = 'scoped memory for tpu_custom_call.1']
    #allocation7 [shape = 'u8[2048]{0}', space=vmem, size = 0x800, scoped, tag = 'input window, operand 2']
    #allocation8 [shape = 'u8[8192]{0}', space=vmem, size = 0x2000, scoped, tag = 'output window, operand 0']
    %8 = vsyncpa [#allocation3], 0
    %9 = vsyncpa [#allocation6], 0
    %s10 = scalar_lea.sflag [#allocation6], 1
    %11 = vsyncpa %s10, 0
    %12 = vsyncpa [#allocation4], 0
    %s13 = scalar_lea.sflag [#allocation4], 1
    %14 = vsyncpa %s13, 0
    loop: start=0, step=1, limit=4
    $region2: #{tpu_custom_call.1} parent=1 // loop_pre_header
      _
    $region3: #{tpu_custom_call.1} parent=1 // loop_header
      %s16 = sphi 0, %s20
      %p17 = scmp.ge.s32.totalorder %s16, 4
      %s24 = sphi 0, %s24
      %s26 = sphi 0, %s24
      %s27 = sphi 0, %s26
      %s41 = sphi 0, %s27
      %s47 = sphi 0, %s49
      %s50 = sphi 0, %s47
      %s51 = sphi 0, %s50
      %s67 = sphi 0, %s51
      %s73 = sphi 0, %s75
      %s76 = sphi 0, %s73
      %s77 = sphi 0, %s76
      %s93 = sphi 0, %s77
      %s99 = sphi 0, %s101
      %s102 = sphi 0, %s99
      %s103 = sphi 0, %s102
      %s119 = sphi 0, %s103
    $region4: #{tpu_custom_call.1} parent=1 // loop_header_branch
      %19 = sbr.rel (%p17) target = $region8
    $region5: #{tpu_custom_call.1} parent=1 // loop_body
      %s21 = ssub.s32 %s16, 1
      %s22 = ssub.s32 %s16, 2
      %s23 = sadd.s32 %s16, 1
      %s25 = sadd.s32 %s24, 1
      %p28 = scmp.eq.s32.totalorder %s16, 1
      %p29 = scmp.ne.s32.totalorder %s24, %s26
      %p30 = scmp.eq.s32.totalorder %s16, 0
      %p31 = por %p29, %p30
      %p32 = scmp.ne.s32.totalorder %s24, %s26
      %p33 = scmp.eq.s32.totalorder %s21, 1
      %p34 = por %p32, %p33
      %p35 = scmp.ne.s32.totalorder %s26, %s27
      %p36 = scmp.eq.s32.totalorder %s21, 0
      %p37 = por %p35, %p36
      %p38 = scmp.ne.s32.totalorder %s26, %s27
      %p39 = scmp.eq.s32.totalorder %s22, 1
      %p40 = por %p38, %p39
      %p42 = scmp.ne.s32.totalorder %s27, %s41
      %p43 = scmp.eq.s32.totalorder %s22, 0
      %p44 = por %p42, %p43
      %s45 = ssub.s32 %s16, %s23
      %p46 = scmp.eq.s32.totalorder %s45, 0
      %s48 = sadd.s32 %s47, 1
      %s49 = scalar_select %p46, %s47, %s48
      %p52 = pneg %p46
      %p53 = scmp.eq.s32.totalorder %s16, 1
      %p54 = por %p52, %p53
      %p55 = scmp.ne.s32.totalorder %s47, %s50
      %p56 = scmp.eq.s32.totalorder %s16, 0
      %p57 = por %p55, %p56
      %p58 = scmp.ne.s32.totalorder %s47, %s50
      %p59 = scmp.eq.s32.totalorder %s21, 1
      %p60 = por %p58, %p59
      %p61 = scmp.ne.s32.totalorder %s50, %s51
      %p62 = scmp.eq.s32.totalorder %s21, 0
      %p63 = por %p61, %p62
      %p64 = scmp.ne.s32.totalorder %s50, %s51
      %p65 = scmp.eq.s32.totalorder %s22, 1
      %p66 = por %p64, %p65
      %p68 = scmp.ne.s32.totalorder %s51, %s67
      %p69 = scmp.eq.s32.totalorder %s22, 0
      %p70 = por %p68, %p69
      %s71 = ssub.s32 %s16, %s23
      %p72 = scmp.eq.s32.totalorder %s71, 0
      %s74 = sadd.s32 %s73, 1
      %s75 = scalar_select %p72, %s73, %s74
      %p78 = pneg %p72
      %p79 = scmp.eq.s32.totalorder %s16, 1
      %p80 = por %p78, %p79
      %p81 = scmp.ne.s32.totalorder %s73, %s76
      %p82 = scmp.eq.s32.totalorder %s16, 0
      %p83 = por %p81, %p82
      %p84 = scmp.ne.s32.totalorder %s73, %s76
      %p85 = scmp.eq.s32.totalorder %s21, 1
      %p86 = por %p84, %p85
      %p87 = scmp.ne.s32.totalorder %s76, %s77
      %p88 = scmp.eq.s32.totalorder %s21, 0
      %p89 = por %p87, %p88
      %p90 = scmp.ne.s32.totalorder %s76, %s77
      %p91 = scmp.eq.s32.totalorder %s22, 1
      %p92 = por %p90, %p91
      %p94 = scmp.ne.s32.totalorder %s77, %s93
      %p95 = scmp.eq.s32.totalorder %s22, 0
      %p96 = por %p94, %p95
      %s97 = ssub.s32 %s16, %s23
      %p98 = scmp.eq.s32.totalorder %s97, 0
      %s100 = sadd.s32 %s99, 1
      %s101 = scalar_select %p98, %s99, %s100
      %p104 = pneg %p98
      %p105 = scmp.eq.s32.totalorder %s16, 1
      %p106 = por %p104, %p105
      %p107 = scmp.ne.s32.totalorder %s99, %s102
      %p108 = scmp.eq.s32.totalorder %s16, 0
      %p109 = por %p107, %p108
      %p110 = scmp.ne.s32.totalorder %s99, %s102
      %p111 = scmp.eq.s32.totalorder %s21, 1
      %p112 = por %p110, %p111
      %p113 = scmp.ne.s32.totalorder %s102, %s103
      %p114 = scmp.eq.s32.totalorder %s21, 0
      %p115 = por %p113, %p114
      %p116 = scmp.ne.s32.totalorder %s102, %s103
      %p117 = scmp.eq.s32.totalorder %s22, 1
      %p118 = por %p116, %p117
      %p120 = scmp.ne.s32.totalorder %s103, %s119
      %p121 = scmp.eq.s32.totalorder %s22, 0
      %p122 = por %p120, %p121
      %p123 = scmp.le.s32.totalorder 1, %s16
      %p124 = scmp.lt.s32.totalorder %s16, 3
      %p125 = pnand %p123, %p124
      %p126 = pneg %p125
      // Predicated region
      $region9: #{tpu_custom_call.1} parent=5 // pred_check
        _
      $region10: #{tpu_custom_call.1} parent=5 // pred_check_branch
        %128 = sbr.rel (%p125) target = $region12
      $region11: #{tpu_custom_call.1} parent=5 // pred_region
        %s129 = ssub.s32 %s16, 1
        // Predicated region
        $region13: #{tpu_custom_call.1} parent=11 // pred_check
          %p130 = pneg %p37
        $region14: #{tpu_custom_call.1} parent=11 // pred_check_branch
          %132 = sbr.rel (%p130) target = $region16
        $region15: #{tpu_custom_call.1} parent=11 // pred_region
          %134 = vsyncadd [#allocation3], 0
          %s136 = sshll.u32 %s0, 4
          %s137 = int_to_ptr.hbm [resolvable:$true] %s136
          %s138 = sshll.u32 [#allocation2], 4
          %s139 = int_to_ptr.vmem [resolvable:$true] %s138
          %141 = dma.hbm_to_vmem [thread:$0]  %s137, 128, %s139, [#allocation3]
        $region16: #{tpu_custom_call.1} parent=11 // pred_fallthru
          _
      $region12: #{tpu_custom_call.1} parent=5 // pred_fallthru
        _
      %p142 = scmp.lt.s32.totalorder %s16, 2
      // Predicated region
      $region17: #{tpu_custom_call.1} parent=5 // pred_check
        %p143 = pneg %p142
      $region18: #{tpu_custom_call.1} parent=5 // pred_check_branch
        %145 = sbr.rel (%p143) target = $region20
      $region19: #{tpu_custom_call.1} parent=5 // pred_region
        // Predicated region
        $region21: #{tpu_custom_call.1} parent=19 // pred_check
          %p146 = pneg %p57
        $region22: #{tpu_custom_call.1} parent=19 // pred_check_branch
          %148 = sbr.rel (%p146) target = $region24
        $region23: #{tpu_custom_call.1} parent=19 // pred_region
          %s149 = sand.u32 %s16, 1
          %s150 = scalar_lea.sflag [#allocation6], %s149
          %s151 = sand.u32 %s47, 1
          %s152 = smul.addr %s151, 128
          %s153 = scalar_lea.vmem [#allocation5], %s152
          %155 = vsyncadd %s150, 0
          %s156 = smul.addr %s16, 4
          %s157 = scalar_lea.hbm %s1, %s156
          %s158 = sshll.u32 %s157, 4
          %s159 = int_to_ptr.hbm [resolvable:$true] %s158
          %s160 = sshll.u32 %s153, 4
          %s161 = int_to_ptr.vmem [resolvable:$true] %s160
          %166 = dma.hbm_to_vmem [thread:$0]  %s159, 2048, %s161, %s150, 128, 64, 4
        $region24: #{tpu_custom_call.1} parent=19 // pred_fallthru
          _
        // Predicated region
        $region25: #{tpu_custom_call.1} parent=19 // pred_check
          %p167 = pneg %p83
        $region26: #{tpu_custom_call.1} parent=19 // pred_check_branch
          %169 = sbr.rel (%p167) target = $region28
        $region27: #{tpu_custom_call.1} parent=19 // pred_region
          %s170 = sand.u32 %s16, 1
          %s171 = scalar_lea.sflag [#allocation6], %s170
          %s172 = sand.u32 %s73, 1
          %s173 = smul.addr %s172, 2
          %s174 = scalar_lea.vmem [#allocation7], %s173
          %176 = vsyncadd %s171, 0
          %s177 = smul.addr %s16, 2
          %s178 = scalar_lea.hbm %s2, %s177
          %s180 = sshll.u32 %s178, 4
          %s181 = int_to_ptr.hbm [resolvable:$true] %s180
          %s182 = sshll.u32 %s174, 4
          %s183 = int_to_ptr.vmem [resolvable:$true] %s182
          %185 = dma.hbm_to_vmem [thread:$0]  %s181, 32, %s183, %s171
        $region28: #{tpu_custom_call.1} parent=19 // pred_fallthru
          _
      $region20: #{tpu_custom_call.1} parent=5 // pred_fallthru
        _
      %p186 = scmp.le.s32.totalorder 1, %s16
      %p187 = scmp.lt.s32.totalorder %s16, 3
      %p188 = pnand %p186, %p187
      %p189 = pneg %p188
      // Predicated region
      $region29: #{tpu_custom_call.1} parent=5 // pred_check
        _
      $region30: #{tpu_custom_call.1} parent=5 // pred_check_branch
        %191 = sbr.rel (%p188) target = $region32
      $region31: #{tpu_custom_call.1} parent=5 // pred_region
        %s192 = ssub.s32 %s16, 1
        // Predicated region
        $region33: #{tpu_custom_call.1} parent=31 // pred_check
          %p193 = pneg %p37
        $region34: #{tpu_custom_call.1} parent=31 // pred_check_branch
          %195 = sbr.rel (%p193) target = $region36
        $region35: #{tpu_custom_call.1} parent=31 // pred_region
          %197 = dma.done [#allocation3], 128
        $region36: #{tpu_custom_call.1} parent=31 // pred_fallthru
          _
        %s198 = sand.u32 %s21, 1
        %s199 = scalar_lea.sflag [#allocation6], %s198
        %s200 = sand.u32 %s50, 1
        %s201 = smul.addr %s200, 128
        %s202 = scalar_lea.vmem [#allocation5], %s201
        // Predicated region
        $region37: #{tpu_custom_call.1} parent=31 // pred_check
          %p203 = pneg %p63
        $region38: #{tpu_custom_call.1} parent=31 // pred_check_branch
          %205 = sbr.rel (%p203) target = $region40
        $region39: #{tpu_custom_call.1} parent=31 // pred_region
          %207 = dma.done %s199, 2048
        $region40: #{tpu_custom_call.1} parent=31 // pred_fallthru
          _
        %s208 = sand.u32 %s21, 1
        %s209 = scalar_lea.sflag [#allocation6], %s208
        %s210 = sand.u32 %s76, 1
        %s211 = smul.addr %s210, 2
        %s212 = scalar_lea.vmem [#allocation7], %s211
        // Predicated region
        $region41: #{tpu_custom_call.1} parent=31 // pred_check
          %p213 = pneg %p89
        $region42: #{tpu_custom_call.1} parent=31 // pred_check_branch
          %215 = sbr.rel (%p213) target = $region44
        $region43: #{tpu_custom_call.1} parent=31 // pred_region
          %217 = dma.done %s209, 32
        $region44: #{tpu_custom_call.1} parent=31 // pred_fallthru
          _
        %p218 = pneg %p37
        %p219 = pneg %p34
        %s220 = sand.u32 %s21, 1
        %s221 = scalar_lea.sflag [#allocation6], %s220
        %s222 = sand.u32 %s50, 1
        %s223 = smul.addr %s222, 128
        %s224 = scalar_lea.vmem [#allocation5], %s223
        %p225 = pneg %p63
        %p226 = pneg %p60
        %s227 = sand.u32 %s21, 1
        %s228 = scalar_lea.sflag [#allocation6], %s227
        %s229 = sand.u32 %s76, 1
        %s230 = smul.addr %s229, 2
        %s231 = scalar_lea.vmem [#allocation7], %s230
        %p232 = pneg %p89
        %p233 = pneg %p86
        %p234 = pneg %p115
        %p235 = pneg %p112
        %s236 = sand.u32 %s102, 1
        %s237 = scalar_lea.sflag [#allocation4], %s236
        %s238 = sand.u32 %s102, 1
        %s239 = smul.addr %s238, 8
        %s240 = scalar_lea.vmem [#allocation8], %s239
        %v241 = vld [vmem:[#allocation2] sm:$0xff]
        %v242 = vld [vmem:[%s202] sm:$0xf]
        %v243 = vld [vmem:[%s202 + $0x4] sm:$0xf]
        %v244 = vld [vmem:[%s202 + $0x8] sm:$0xf]
        %v245 = vld [vmem:[%s202 + $0xc] sm:$0xf]
        %v246 = vld [vmem:[%s202 + $0x10] sm:$0xf]
        %v247 = vld [vmem:[%s202 + $0x14] sm:$0xf]
        %v248 = vld [vmem:[%s202 + $0x18] sm:$0xf]
        %v249 = vld [vmem:[%s202 + $0x1c] sm:$0xf]
        %v250 = vld [vmem:[%s202 + $0x20] sm:$0xf]
        %v251 = vld [vmem:[%s202 + $0x24] sm:$0xf]
        %v252 = vld [vmem:[%s202 + $0x28] sm:$0xf]
        %v253 = vld [vmem:[%s202 + $0x2c] sm:$0xf]
        %v254 = vld [vmem:[%s202 + $0x30] sm:$0xf]
        %v255 = vld [vmem:[%s202 + $0x34] sm:$0xf]
        %v256 = vld [vmem:[%s202 + $0x38] sm:$0xf]
        %v257 = vld [vmem:[%s202 + $0x3c] sm:$0xf]
        %v258 = vld [vmem:[%s202 + $0x40] sm:$0xf]
        %v259 = vld [vmem:[%s202 + $0x44] sm:$0xf]
        %v260 = vld [vmem:[%s202 + $0x48] sm:$0xf]
        %v261 = vld [vmem:[%s202 + $0x4c] sm:$0xf]
        %v262 = vld [vmem:[%s202 + $0x50] sm:$0xf]
        %v263 = vld [vmem:[%s202 + $0x54] sm:$0xf]
        %v264 = vld [vmem:[%s202 + $0x58] sm:$0xf]
        %v265 = vld [vmem:[%s202 + $0x5c] sm:$0xf]
        %v266 = vld [vmem:[%s202 + $0x60] sm:$0xf]
        %v267 = vld [vmem:[%s202 + $0x64] sm:$0xf]
        %v268 = vld [vmem:[%s202 + $0x68] sm:$0xf]
        %v269 = vld [vmem:[%s202 + $0x6c] sm:$0xf]
        %v270 = vld [vmem:[%s202 + $0x70] sm:$0xf]
        %v271 = vld [vmem:[%s202 + $0x74] sm:$0xf]
        %v272 = vld [vmem:[%s202 + $0x78] sm:$0xf]
        %v273 = vld [vmem:[%s202 + $0x7c] sm:$0xf]
        %v275 = vunpack.c.l.b16 %v241
        %v276 = vunpack.c.h.b16 %v241
        %v277 = vpack.c.b16 %v275, %v275
        %v278 = vpack.c.b16 %v276, %v276
        %v313 = vunpack.c.l.b16 %v242
        %v314 = vunpack.c.l.b16 %v243
        %v315 = vunpack.c.l.b16 %v244
        %v316 = vunpack.c.l.b16 %v245
        %v317 = vunpack.c.l.b16 %v246
        %v318 = vunpack.c.l.b16 %v247
        %v319 = vunpack.c.l.b16 %v248
        %v320 = vunpack.c.l.b16 %v249
        %v321 = vunpack.c.l.b16 %v250
        %v322 = vunpack.c.l.b16 %v251
        %v323 = vunpack.c.l.b16 %v252
        %v324 = vunpack.c.l.b16 %v253
        %v325 = vunpack.c.l.b16 %v254
        %v326 = vunpack.c.l.b16 %v255
        %v327 = vunpack.c.l.b16 %v256
        %v328 = vunpack.c.l.b16 %v257
        %v329 = vunpack.c.l.b16 %v258
        %v330 = vunpack.c.l.b16 %v259
        %v331 = vunpack.c.l.b16 %v260
        %v332 = vunpack.c.l.b16 %v261
        %v333 = vunpack.c.l.b16 %v262
        %v334 = vunpack.c.l.b16 %v263
        %v335 = vunpack.c.l.b16 %v264
        %v336 = vunpack.c.l.b16 %v265
        %v337 = vunpack.c.l.b16 %v266
        %v338 = vunpack.c.l.b16 %v267
        %v339 = vunpack.c.l.b16 %v268
        %v340 = vunpack.c.l.b16 %v269
        %v341 = vunpack.c.l.b16 %v270
        %v342 = vunpack.c.l.b16 %v271
        %v343 = vunpack.c.l.b16 %v272
        %v344 = vunpack.c.l.b16 %v273
        %v345 = vpack.c.b16 %v314, %v313
        %v346 = vpack.c.b16 %v316, %v315
        %v347 = vpack.c.b16 %v318, %v317
        %v348 = vpack.c.b16 %v320, %v319
        %v349 = vpack.c.b16 %v322, %v321
        %v350 = vpack.c.b16 %v324, %v323
        %v351 = vpack.c.b16 %v326, %v325
        %v352 = vpack.c.b16 %v328, %v327
        %v353 = vpack.c.b16 %v330, %v329
        %v354 = vpack.c.b16 %v332, %v331
        %v355 = vpack.c.b16 %v334, %v333
        %v356 = vpack.c.b16 %v336, %v335
        %v357 = vpack.c.b16 %v338, %v337
        %v358 = vpack.c.b16 %v340, %v339
        %v359 = vpack.c.b16 %v342, %v341
        %v360 = vpack.c.b16 %v344, %v343
        %377 = vmatpush.bf16.msra.mxu0 %v352
        %378 = vmatpush.bf16.msra.mxu0 %v351
        %379 = vmatpush.bf16.msra.mxu0 %v350
        %380 = vmatpush.bf16.msra.mxu0 %v349
        %381 = vmatpush.bf16.msra.mxu0 %v348
        %382 = vmatpush.bf16.msra.mxu0 %v347
        %383 = vmatpush.bf16.msra.mxu0 %v346
        %384 = vmatpush.bf16.msra.mxu0 %v345
        %385 = vmatmul.bf16.gmra.mxu0 %v277
        %v386 = vpop.f32.mrf.mxu0
        %v387 = vadd.f32 0.0, %v386
        %v388 = vpop.f32.mrf.mxu0
        %389 = vdwg.mxu0
        %390 = vmatpush.bf16.msra.mxu0 %v360
        %391 = vmatpush.bf16.msra.mxu0 %v359
        %392 = vmatpush.bf16.msra.mxu0 %v358
        %393 = vmatpush.bf16.msra.mxu0 %v357
        %394 = vmatpush.bf16.msra.mxu0 %v356
        %395 = vmatpush.bf16.msra.mxu0 %v355
        %396 = vmatpush.bf16.msra.mxu0 %v354
        %397 = vmatpush.bf16.msra.mxu0 %v353
        %398 = vmatmul.bf16.gmra.mxu0 %v278
        %v399 = vpop.f32.mrf.mxu0
        %v400 = vadd.f32 %v387, %v399
        %v401 = vpop.f32.mrf.mxu0
        %402 = vdwg.mxu0
        %v403 = vrot.slane %v400, 4
        %v404 = vadd.f32 %v400, %v403
        %v405 = vrot.slane %v404, 2
        %v406 = vadd.f32 %v404, %v405
        %v407 = vrot.slane %v406, 1
        %v408 = vadd.f32 %v406, %v407
        %v409 = vmul.f32 %v408, 0.125
        %v410 = vmul.f32 %v400, %v400
        %v411 = vrot.slane %v410, 4
        %v412 = vadd.f32 %v410, %v411
        %v413 = vrot.slane %v412, 2
        %v414 = vadd.f32 %v412, %v413
        %v415 = vrot.slane %v414, 1
        %v416 = vadd.f32 %v414, %v415
        %v417 = vmul.f32 %v416, 0.125
        %v418 = vmul.f32 %v409, %v409
        %v419 = vsub.f32 %v417, %v418
        %v420 = vld [vmem:[%s212] sm:$0x1]
        %v421 = vld [vmem:[%s212 + $0x1] sm:$0x1]
        %v422 = vadd.f32 %v419, 1e-05
        %v423 = vrsqrt.pop %v422
        %v424 = vmul.f32 %v423, %v422
        %v425 = vmul.f32 %v424, %v423
        %v426 = vmul.f32 0.5, %v425
        %v427 = vsub.f32 1.5, %v426
        %v428 = vmul.f32 %v423, %v427
        %vm429 = vweird.f32 %v422
        %vm430 = vweird.f32 %v423
        %vm431 = vmor %vm429, %vm430
        %v432 = vsel %vm431, %v423, %v428
        %v433 = vmul.f32 %v420, %v432
        %v434 = vmul.f32 %v409, %v433
        %v435 = vsub.f32 %v421, %v434
        %v436 = vperm.slane %v433, 0
        %v437 = vmul.f32 %v400, %v436
        %v438 = vperm.slane %v435, 0
        %v439 = vadd.f32 %v437, %v438
        %v440 = vmax.f32 %v439, 0.0
        %441 = vst [vmem:[%s240] sm:$0xff] %v440
        %s442 = sand.u32 %s102, 1
        %s443 = scalar_lea.sflag [#allocation4], %s442
        %s444 = sand.u32 %s102, 1
        %s445 = smul.addr %s444, 8
        %s446 = scalar_lea.vmem [#allocation8], %s445
        // Predicated region
        $region45: #{tpu_custom_call.1} parent=31 // pred_check
          %p447 = pneg %p112
        $region46: #{tpu_custom_call.1} parent=31 // pred_check_branch
          %449 = sbr.rel (%p447) target = $region48
        $region47: #{tpu_custom_call.1} parent=31 // pred_region
          %451 = vsyncadd %s443, 0
          %s452 = smul.addr %s21, 8
          %s453 = scalar_lea.hbm %s3, %s452
          %s455 = sshll.u32 %s446, 4
          %s456 = int_to_ptr.vmem [resolvable:$true] %s455
          %s457 = sshll.u32 %s453, 4
          %s458 = int_to_ptr.hbm [resolvable:$true] %s457
          %460 = dma.vmem_to_hbm [thread:$0]  %s456, 128, %s458, %s443
        $region48: #{tpu_custom_call.1} parent=31 // pred_fallthru
          _
      $region32: #{tpu_custom_call.1} parent=5 // pred_fallthru
        _
      %p461 = scmp.le.s32.totalorder 2, %s16
      // Predicated region
      $region49: #{tpu_custom_call.1} parent=5 // pred_check
        %p462 = pneg %p461
      $region50: #{tpu_custom_call.1} parent=5 // pred_check_branch
        %464 = sbr.rel (%p462) target = $region52
      $region51: #{tpu_custom_call.1} parent=5 // pred_region
        %s465 = ssub.s32 %s16, 2
        // Predicated region
        $region53: #{tpu_custom_call.1} parent=51 // pred_check
          %p466 = pneg %p118
        $region54: #{tpu_custom_call.1} parent=51 // pred_check_branch
          %468 = sbr.rel (%p466) target = $region56
        $region55: #{tpu_custom_call.1} parent=51 // pred_region
          %s469 = sand.u32 %s103, 1
          %s470 = scalar_lea.sflag [#allocation4], %s469
          %s471 = sand.u32 %s103, 1
          %s472 = smul.addr %s471, 8
          %s473 = scalar_lea.vmem [#allocation8], %s472
          %475 = dma.done %s470, 128
        $region56: #{tpu_custom_call.1} parent=51 // pred_fallthru
          _
      $region52: #{tpu_custom_call.1} parent=5 // pred_fallthru
        _
    $region6: #{tpu_custom_call.1} parent=1 // loop_footer
      %s20 = sadd.s32 1, %s16
    $region7: #{tpu_custom_call.1} parent=1 // loop_footer_branch
      %15 = sbr.rel target = $region3
    $region8: #{tpu_custom_call.1} parent=1 // loop_exit
      _
    %476 = vsyncpa [#allocation3], 1
    %s477 = scalar_lea.sflag [#allocation3], 1
    %478 = vsyncpa %s477, 1
    %479 = vsyncpa [#allocation6], 1
    %s480 = scalar_lea.sflag [#allocation6], 1
    %481 = vsyncpa %s480, 1
    %482 = vsyncpa [#allocation4], 1
    %s483 = scalar_lea.sflag [#allocation4], 1
    %484 = vsyncpa %s483, 1

</llo_original>
